<compile_context>
chip_gen: v7x
topology: tpu7x:2x2x1
jax: 0.10.0
libtpu: 0.0.40
codegen_flags: <defaults>
</compile_context>

<pallas_src>
import functools

import jax
import jax.numpy as jnp
import numpy as np
from jax.experimental import pallas as pl
from jax.experimental.pallas import tpu as pltpu


def _make_kernel(tile_n: int):
    def kernel(idx_ref, o_ref):
        # idx_ref: (TILE_B, 1) int32 flat hot position per row.
        # o_ref:   (TILE_B, TILE_N) one-hot output tile.
        base = pl.program_id(1) * tile_n            # scalar feature-tile offset
        lane = jax.lax.broadcasted_iota(jnp.int32, o_ref.shape, 1) + base
        o_ref[...] = (lane == idx_ref[...]).astype(o_ref.dtype)

    return kernel


def _round_up(x: int, m: int) -> int:
    return ((x + m - 1) // m) * m


def qfeature_map_one_hot(
    x: jax.Array,
    num_classes: int = 2,
    *,
    out_dtype=jnp.int32,          # int8 / bfloat16 cut HBM writeback 4x / 2x if downstream allows
    max_tile_n: int = 2048,       # lanes per feature tile (multiple of 128)
    max_tile_b: int = 256,        # rows per batch tile
) -> jax.Array:
    """x: (batch, dim) integer indices -> (batch, num_classes**dim) one-hot."""
    batch, dim = x.shape
    out_dim = num_classes ** dim                      # python int, no wraparound
    if out_dim >= 2 ** 31:
        raise ValueError(
            f"num_classes**dim = {out_dim} overflows int32 indexing; "
            "use smaller num_classes/dim."
        )

    # Mixed-radix weights: num_classes**(dim-1-i) (earliest column varies slowest,
    # matching the iterated outer product in the PyTorch forward).
    weights = jnp.asarray(
        [num_classes ** (dim - 1 - i) for i in range(dim)], dtype=jnp.int32
    )
    # Tiny XLA op: per-row flat hot position, fed to the kernel as an input
    # (kernel must not capture array constants).
    flat_idx = jnp.sum(x.astype(jnp.int32) * weights[None, :], axis=1, keepdims=True)

    # --- tile selection -----------------------------------------------------
    padded128 = _round_up(out_dim, 128)               # lane-dense width
    m = padded128 // 128
    cap = max(1, max_tile_n // 128)
    # Largest divisor of m that is <= cap -> tile divides padded width exactly,
    # so every output store is a full unmasked 128-multiple block.
    d = 1
    for cand in range(min(m, cap), 0, -1):
        if m % cand == 0:
            d = cand
            break
    tile_n = 128 * d
    padded_out = padded128                            # tile_n divides this exactly

    tile_b = batch if batch <= max_tile_b else max_tile_b

    grid = (pl.cdiv(batch, tile_b), pl.cdiv(padded_out, tile_n))

    out = pl.pallas_call(
        _make_kernel(tile_n),
        out_shape=jax.ShapeDtypeStruct((batch, padded_out), out_dtype),
        grid=grid,
        in_specs=[
            # (tile_b, 1) flat index block; same block across all feature tiles
            # (feature axis innermost) so it stays resident.
            pl.BlockSpec((tile_b, 1), lambda b, j: (b, 0)),
        ],
        out_specs=pl.BlockSpec((tile_b, tile_n), lambda b, j: (b, j)),
        compiler_params=pltpu.CompilerParams(
            dimension_semantics=("parallel", "parallel"),
        ),
    )(flat_idx)

    if padded_out != out_dim:
        out = out[:, :out_dim]                        # drop lane padding
    return out


def _reference(x: np.ndarray, num_classes: int) -> np.ndarray:
    # Pure numpy reimplementation of the PyTorch forward (iterated outer product).
    b, dim = x.shape
    out = np.eye(num_classes, dtype=np.int64)[x]      # (b, dim, C)
    t_psi = out[:, 0, :]
    for i in range(1, dim):
        t_psi = np.einsum("bi,bj->bij", t_psi, out[:, i, :]).reshape(b, -1)
    return t_psi


if __name__ == "__main__":
    key = jax.random.PRNGKey(0)

    # Case 1: num_classes=2, dim=8 -> out_dim = 256 (already 128-multiple).
    batch, dim, num_classes = 8, 8, 2
    x = jax.random.randint(key, (batch, dim), 0, num_classes, dtype=jnp.int32)
    y = jax.block_until_ready(qfeature_map_one_hot(x, num_classes=num_classes))
    y_ref = _reference(np.asarray(x), num_classes)
    assert y.shape == (batch, num_classes ** dim)
    assert np.array_equal(np.asarray(y), y_ref.astype(np.int32))

    # Case 2: num_classes=3, dim=5 -> out_dim = 243 (exercises lane padding/slice).
    batch2, dim2, num_classes2 = 8, 5, 3
    x2 = jax.random.randint(
        jax.random.PRNGKey(1), (batch2, dim2), 0, num_classes2, dtype=jnp.int32
    )
    y2 = jax.block_until_ready(qfeature_map_one_hot(x2, num_classes=num_classes2))
    y2_ref = _reference(np.asarray(x2), num_classes2)
    assert y2.shape == (batch2, num_classes2 ** dim2)
    assert np.array_equal(np.asarray(y2), y2_ref.astype(np.int32))

    print("KERNEL_OK")
</pallas_src>

<mosaic_0001>
module attributes {stable_mosaic.version = 11 : i64} {
  func.func @kernel(%arg0: i32, %arg1: i32, %arg2: memref<8x1xi32, #tpu.memory_space<vmem>>, %arg3: memref<8x256xi32, #tpu.memory_space<vmem>>) attributes {dimension_semantics = [#tpu.dimension_semantics<parallel>, #tpu.dimension_semantics<parallel>], iteration_bounds = array<i64: 1, 1>, scalar_prefetch = 0 : i64, scratch_operands = 0 : i64, tpu.core_type = #tpu.core_type<tc>, window_params = [{transform_indices = @transform_0, window_bounds = array<i64: 8, 1>}, {transform_indices = @transform_1, window_bounds = array<i64: 8, 256>}]} {
    %c256_i32 = arith.constant 256 : i32
    %0 = arith.muli %arg1, %c256_i32 : i32
    %1 = tpu.iota {dimensions = array<i32: 1>} : vector<8x256xi32>
    %2 = vector.broadcast %0 : i32 to vector<8x256xi32>
    %3 = arith.addi %1, %2 : vector<8x256xi32>
    %c0 = arith.constant 0 : index
    %c0_0 = arith.constant 0 : index
    %4 = vector.load %arg2[%c0, %c0_0] : memref<8x1xi32, #tpu.memory_space<vmem>>, vector<8x1xi32>
    %5 = vector.broadcast %4 : vector<8x1xi32> to vector<8x256xi32>
    %6 = arith.cmpi eq, %3, %5 : vector<8x256xi32>
    %7 = arith.extui %6 : vector<8x256xi1> to vector<8x256xi32>
    %c0_1 = arith.constant 0 : index
    %c0_2 = arith.constant 0 : index
    %8 = vector.load %arg3[%c0_1, %c0_2] : memref<8x256xi32, #tpu.memory_space<vmem>>, vector<8x256xi32>
    tpu.vector_store %arg3[%c0_1, %c0_2], %7 {strides = array<i32>} : memref<8x256xi32, #tpu.memory_space<vmem>>, vector<8x256xi32>,
    return
  }
  func.func @transform_0(%arg0: i32, %arg1: i32) -> (i32, i32) {
    %c0_i32 = arith.constant 0 : i32
    %c0_i32_0 = arith.constant 0 : i32
    return %arg0, %c0_i32 : i32, i32
  }
  func.func @transform_1(%arg0: i32, %arg1: i32) -> (i32, i32) {
    %c0_i32 = arith.constant 0 : i32
    return %arg0, %arg1 : i32, i32
  }
}

</mosaic_0001>

<llo_original>
// kernel: tpu_custom_call.1
$region0: #{tpu_custom_call.1}
  #allocation0 [shape = 'u32[]', space=smem, size = 0x4, offset = 0x4, fixed_abs, tag = 'smem constant byte address 0x4 - core index']
  #allocation1 [shape = 'u32[144,128]{1,0:T(1,128)}', space=vmem, size = 0x12000, scoped, tag = 'internal scratch']
  %s0 = inlined_call_operand.vmem [shape: s32[8,1], index: 0, kind: input, shape index: {}]
  %s1 = inlined_call_operand.hbm [shape: s32[8,256], index: 1, kind: output, shape index: {}]
  %s2 = sld [smem:[#allocation0]]
  $region14: #{tpu_custom_call.1} parent=0
    _
  %s4 = ssub.s32 1, %s2
  %s5 = scalar_select 0, %s4, %s2
  $region1: #{tpu_custom_call.1} parent=0
    #allocation2 [shape = 'u8[8192]{0}', space=vmem, size = 0x2000, scoped, tag = 'output window, operand 0, single buffered']
    #allocation3 [shape = 's32[1]{0}', space=sflag, size = 0x4, scoped, tag = 'scoped memory for tpu_custom_call.1']
    %6 = vsyncpa [#allocation3], 0
    // Predicated region
    $region2: #{tpu_custom_call.1} parent=1 // pred_check
      _
    $region3: #{tpu_custom_call.1} parent=1 // pred_check_branch
      %8 = sbr.rel (0) target = $region5
    $region4: #{tpu_custom_call.1} parent=1 // pred_region
      _
    $region5: #{tpu_custom_call.1} parent=1 // pred_fallthru
      _
    %s9 = smul.u32 0, 256
    %v10 = vlaneseq
    %v11 = vand.u32 %v10, 127
    %v12 = vadd.s32 %v11, 128
    %v13 = vstv %s9
    %v14 = vadd.s32 %v11, %v13
    %v15 = vadd.s32 %v12, %v13
    %v16 = vld [vmem:[%s0] sm:$0xff]
    %17 = vset.pattern.permute.xlu0 0
    %18 = vperm.xlu0 %17, %v16
    %v19 = vpop.permute.xlu0 %18
    %vm20 = vcmp.eq.s32.totalorder %v14, %v19
    %vm21 = vcmp.eq.s32.totalorder %v15, %v19
    %v22 = vsel %vm20, 1, 0
    %v23 = vsel %vm21, 1, 0
    %24 = vst [vmem:[#allocation2] sm:$0xff] %v22
    %25 = vst [vmem:[#allocation2 + $0x8] sm:$0xff] %v23
    // Predicated region
    $region6: #{tpu_custom_call.1} parent=1 // pred_check
      _
    $region7: #{tpu_custom_call.1} parent=1 // pred_check_branch
      %27 = sbr.rel (0) target = $region9
    $region8: #{tpu_custom_call.1} parent=1 // pred_region
      %s29 = ssub.s32 256, 256
      %30 = vsyncadd [#allocation3], %s29
      %s32 = sshll.u32 [#allocation2], 4
      %s33 = int_to_ptr.vmem [resolvable:$true] %s32
      %35 = dma.vmem_to_hbm [thread:$0]  %s33, 256, %s1, [#allocation3]
    $region9: #{tpu_custom_call.1} parent=1 // pred_fallthru
      _
    // Predicated region
    $region10: #{tpu_custom_call.1} parent=1 // pred_check
      _
    $region11: #{tpu_custom_call.1} parent=1 // pred_check_branch
      %37 = sbr.rel (0) target = $region13
    $region12: #{tpu_custom_call.1} parent=1 // pred_region
      %38 = dma.done [#allocation3], 256
    $region13: #{tpu_custom_call.1} parent=1 // pred_fallthru
      _
    %39 = vsyncpa [#allocation3], 1

</llo_original>
